<compile_context>
chip_gen: v6e
topology: v6e:2x2x1
jax: 0.10.0
libtpu: 0.0.40
codegen_flags: <defaults>
</compile_context>

<pallas_src>
import functools

import jax
import jax.numpy as jnp
from jax.experimental import pallas as pl
from jax.experimental.pallas import tpu as pltpu


def _gate_kernel_vpu(x_ref, y_ref, wz_ref, uz_ref, o_ref, *, C, bg):
    """Small-C path (C <= 8): full-(C, TP)-tile broadcast FMAs on the VPU.

    pre[:, p] = sum_i wz[:, i] * y[i, p] + uz[:, i] * x[i, p]
    The (C, 1) weight column lane-broadcasts, the (1, TP) activation row
    sublane-broadcasts, so every FMA covers the whole (C, TP) tile.
    """
    wz = wz_ref[...]                                     # (C, C) f32, VMEM resident
    uz = uz_ref[...]
    # Accumulate the channel mix with ref row-slices (keeps vreg pressure low).
    pre = (wz[:, 0:1] * y_ref[0:1, :].astype(jnp.float32)
           + uz[:, 0:1] * x_ref[0:1, :].astype(jnp.float32))
    for i in range(1, C):
        pre = (pre
               + wz[:, i:i + 1] * y_ref[i:i + 1, :].astype(jnp.float32)
               + uz[:, i:i + 1] * x_ref[i:i + 1, :].astype(jnp.float32))
    z = jax.nn.sigmoid(pre - bg)                         # one EUP pass over the tile
    x = x_ref[...].astype(jnp.float32)
    y = y_ref[...].astype(jnp.float32)
    o_ref[...] = ((1.0 - z) * x + z * y).astype(o_ref.dtype)   # single dense store


def _gate_kernel_mxu(x_ref, y_ref, wz_ref, uz_ref, o_ref, *, bg):
    """Large-C path: (C, C) @ (C, TP) on the MXU, f32 accumulation.

    Operands are fed in their native dtype (no full-tile f32 pre-cast);
    f32 operands use HIGHEST precision for parity with the reference (the
    extra MXU passes are hidden under the HBM-bound roofline).
    """
    x = x_ref[...]
    y = y_ref[...]
    prec = (jax.lax.Precision.HIGHEST if x.dtype == jnp.float32
            else jax.lax.Precision.DEFAULT)
    pre = (jnp.dot(wz_ref[...], y, preferred_element_type=jnp.float32, precision=prec)
           + jnp.dot(uz_ref[...], x, preferred_element_type=jnp.float32, precision=prec)
           - bg)
    z = jax.nn.sigmoid(pre)
    xf = x.astype(jnp.float32)
    yf = y.astype(jnp.float32)
    o_ref[...] = ((1.0 - z) * xf + z * yf).astype(o_ref.dtype)


def _chip_config():
    """Generation-aware (vmem_budget, vmem_limit, min_grid_steps)."""
    try:
        vmem_cap = pltpu.get_tpu_info().vmem_capacity_bytes
    except Exception:
        vmem_cap = 64 * 1024 * 1024          # unknown: assume v7x-sized VMEM (safe)
    if vmem_cap >= 100 * 1024 * 1024:        # v5e / v6e: 128 MiB VMEM, 1 TC
        return 48 * 1024 * 1024, 64 * 1024 * 1024, 2
    # v7x: 64 MiB VMEM per TC, 2 TCs -> smaller tiles, >=4 grid steps.
    return 24 * 1024 * 1024, 40 * 1024 * 1024, 4


def _choose_tile_pixels(HW, C, itemsize, N, *, vmem_budget, min_grid_steps,
                        target_tile_bytes=8 * 1024 * 1024):
    """Pixel tile: multiple of 128, multi-MB DMA bursts, fits the VMEM budget."""
    # x/y/out double-buffered + ~5 f32 full-tile intermediates of headroom.
    per_pixel = C * (3 * 2 * itemsize + 5 * 4)
    weight_bytes = 2 * 2 * C * C * 4                     # 2 weights, 2 buffers, f32
    tp_budget = max(128, (vmem_budget - weight_bytes) // max(per_pixel, 1))
    tp_target = max(128, target_tile_bytes // max(C * itemsize, 1))
    tp = max(128, (min(tp_budget, tp_target) // 128) * 128)
    if HW <= tp:
        tp = HW                                          # full-extent block: always legal
    # Enough grid steps for DMA pipelining / v7x megacore sharding.
    if HW > 128 and N * pl.cdiv(HW, tp) < min_grid_steps:
        want_tiles = pl.cdiv(min_grid_steps, N)
        tp_small = max(128, ((pl.cdiv(HW, want_tiles) + 127) // 128) * 128)
        tp = min(tp, tp_small)
    return tp


def gate_forward(x_nchw, y_nchw, wz, uz, bg=0.1, *,
                 tile_pixels=None, vpu_max_channels=8):
    """x_nchw, y_nchw: (N, C, H, W).  wz, uz: (C, C) (out_ch, in_ch)."""
    N, C, H, W = x_nchw.shape
    HW = H * W
    act_dtype = x_nchw.dtype
    # Merging H and W is a free reshape (no HBM relayout).
    x3 = x_nchw.reshape(N, C, HW)
    y3 = y_nchw.reshape(N, C, HW)

    use_vpu = C <= vpu_max_channels
    # VPU path and f32 activations keep f32 weights; bf16 MXU path matches
    # weight dtype to the activations so the dot is a single bf16 MXU pass.
    w_dtype = jnp.float32 if (use_vpu or act_dtype == jnp.float32) else act_dtype
    wz = wz.astype(w_dtype)
    uz = uz.astype(w_dtype)

    vmem_budget, vmem_limit, min_steps = _chip_config()
    itemsize = jnp.dtype(act_dtype).itemsize
    tp = tile_pixels if tile_pixels is not None else _choose_tile_pixels(
        HW, C, itemsize, N, vmem_budget=vmem_budget, min_grid_steps=min_steps)
    grid = (N, pl.cdiv(HW, tp))

    def feat_spec():
        return pl.BlockSpec((None, C, tp), lambda n, p: (n, 0, p))

    # Constant index_map -> weights fetched once and stay VMEM-resident
    # (no re-DMA across grid steps); the second buffer is counted in the budget.
    w_spec = pl.BlockSpec((C, C), lambda n, p: (0, 0))

    if use_vpu:
        kernel = functools.partial(_gate_kernel_vpu, C=C, bg=float(bg))
    else:
        kernel = functools.partial(_gate_kernel_mxu, bg=float(bg))

    out3 = pl.pallas_call(
        kernel,
        out_shape=jax.ShapeDtypeStruct((N, C, HW), act_dtype),
        grid_spec=pltpu.PrefetchScalarGridSpec(
            num_scalar_prefetch=0,
            grid=grid,
            in_specs=[feat_spec(), feat_spec(), w_spec, w_spec],
            out_specs=feat_spec(),
        ),
        compiler_params=pltpu.CompilerParams(
            dimension_semantics=("parallel", "parallel"),
            vmem_limit_bytes=vmem_limit,
        ),
    )(x3, y3, wz, uz)

    return out3.reshape(N, C, H, W)


def xavier_uniform_conv1x1(key, c_out, c_in):
    # fan_in = c_in * 1 * 1, fan_out = c_out * 1 * 1
    bound = (6.0 / (c_in + c_out)) ** 0.5
    return jax.random.uniform(key, (c_out, c_in), jnp.float32, -bound, bound)


def gate_reference(x, y, wz, uz, bg):
    # Pure-JAX reference of the PyTorch forward (1x1 conv == channel einsum).
    conv = lambda w, t: jnp.einsum("oi,nihw->nohw", w, t,
                                   precision=jax.lax.Precision.HIGHEST)
    z = jax.nn.sigmoid(conv(wz, y) + conv(uz, x) - bg)
    return (1.0 - z) * x + z * y


if __name__ == "__main__":
    key = jax.random.PRNGKey(0)
    k1, k2, k3, k4, k5, k6, k7, k8 = jax.random.split(key, 8)
    bg = 0.1

    # --- Small-C config matching the module (d_input = 4): full-tile VPU path -
    N, C, H, W = 2, 4, 16, 16
    x = jax.random.normal(k1, (N, C, H, W), jnp.float32)
    y = jax.random.normal(k2, (N, C, H, W), jnp.float32)
    wz = xavier_uniform_conv1x1(k3, C, C)
    uz = xavier_uniform_conv1x1(k4, C, C)

    out = jax.block_until_ready(gate_forward(x, y, wz, uz, bg))
    ref = gate_reference(x, y, wz, uz, bg)
    assert out.shape == (N, C, H, W)
    assert jnp.allclose(out, ref, atol=1e-5, rtol=1e-5), (
        f"small-C f32 mismatch: {jnp.max(jnp.abs(out - ref))}")

    # --- bf16 activation I/O on the same path (f32 accumulation in-kernel) ---
    x_bf = x.astype(jnp.bfloat16)
    y_bf = y.astype(jnp.bfloat16)
    out_bf = jax.block_until_ready(gate_forward(x_bf, y_bf, wz, uz, bg))
    ref_bf = gate_reference(x_bf.astype(jnp.float32), y_bf.astype(jnp.float32),
                            wz, uz, bg)
    assert out_bf.dtype == jnp.bfloat16
    assert float(jnp.max(jnp.abs(out_bf.astype(jnp.float32) - ref_bf))) < 3e-2, (
        "small-C bf16 mismatch")

    # --- Large-C config exercising the MXU path (HIGHEST precision for f32) --
    N2, C2, H2, W2 = 1, 128, 16, 16
    x2 = jax.random.normal(k5, (N2, C2, H2, W2), jnp.float32)
    y2 = jax.random.normal(k6, (N2, C2, H2, W2), jnp.float32)
    wz2 = xavier_uniform_conv1x1(k7, C2, C2)
    uz2 = xavier_uniform_conv1x1(k8, C2, C2)

    out2 = jax.block_until_ready(gate_forward(x2, y2, wz2, uz2, bg))
    ref2 = gate_reference(x2, y2, wz2, uz2, bg)
    assert out2.shape == (N2, C2, H2, W2)
    assert jnp.allclose(out2, ref2, atol=1e-4, rtol=1e-4), (
        f"large-C mismatch: {jnp.max(jnp.abs(out2 - ref2))}")

    print("KERNEL_OK")
</pallas_src>

<mosaic_0001>
module attributes {stable_mosaic.version = 11 : i64} {
  func.func @_gate_kernel_vpu(%arg0: i32, %arg1: i32, %arg2: memref<1x4x128xf32, #tpu.memory_space<vmem>>, %arg3: memref<1x4x128xf32, #tpu.memory_space<vmem>>, %arg4: memref<4x4xf32, #tpu.memory_space<vmem>>, %arg5: memref<4x4xf32, #tpu.memory_space<vmem>>, %arg6: memref<1x4x128xf32, #tpu.memory_space<vmem>>) attributes {dimension_semantics = [#tpu.dimension_semantics<parallel>, #tpu.dimension_semantics<parallel>], iteration_bounds = array<i64: 2, 2>, scalar_prefetch = 0 : i64, scratch_operands = 0 : i64, tpu.core_type = #tpu.core_type<tc>, window_params = [{transform_indices = @transform_0, window_bounds = array<i64: 1, 4, 128>}, {transform_indices = @transform_1, window_bounds = array<i64: 1, 4, 128>}, {pipeline_mode = #tpu.pipeline_mode<synchronous>, transform_indices = @transform_2, window_bounds = array<i64: 4, 4>}, {pipeline_mode = #tpu.pipeline_mode<synchronous>, transform_indices = @transform_3, window_bounds = array<i64: 4, 4>}, {transform_indices = @transform_4, window_bounds = array<i64: 1, 4, 128>}]} {
    %c0 = arith.constant 0 : index
    %c0_0 = arith.constant 0 : index
    %0 = vector.load %arg4[%c0, %c0_0] : memref<4x4xf32, #tpu.memory_space<vmem>>, vector<4x4xf32>
    %c0_1 = arith.constant 0 : index
    %c0_2 = arith.constant 0 : index
    %1 = vector.load %arg5[%c0_1, %c0_2] : memref<4x4xf32, #tpu.memory_space<vmem>>, vector<4x4xf32>
    %2 = vector.extract_strided_slice %0 {offsets = [0, 0], sizes = [4, 1], strides = [1, 1]} : vector<4x4xf32> to vector<4x1xf32>
    %c0_3 = arith.constant 0 : index
    %c0_4 = arith.constant 0 : index
    %c0_5 = arith.constant 0 : index
    %3 = vector.load %arg3[%c0_3, %c0_4, %c0_5] : memref<1x4x128xf32, #tpu.memory_space<vmem>>, vector<1x1x128xf32>
    %4 = vector.shape_cast %3 : vector<1x1x128xf32> to vector<1x128xf32>
    %5 = vector.broadcast %2 : vector<4x1xf32> to vector<4x128xf32>
    %6 = vector.broadcast %4 : vector<1x128xf32> to vector<4x128xf32>
    %7 = arith.mulf %5, %6 : vector<4x128xf32>
    %8 = vector.extract_strided_slice %1 {offsets = [0, 0], sizes = [4, 1], strides = [1, 1]} : vector<4x4xf32> to vector<4x1xf32>
    %c0_6 = arith.constant 0 : index
    %c0_7 = arith.constant 0 : index
    %c0_8 = arith.constant 0 : index
    %9 = vector.load %arg2[%c0_6, %c0_7, %c0_8] : memref<1x4x128xf32, #tpu.memory_space<vmem>>, vector<1x1x128xf32>
    %10 = vector.shape_cast %9 : vector<1x1x128xf32> to vector<1x128xf32>
    %11 = vector.broadcast %8 : vector<4x1xf32> to vector<4x128xf32>
    %12 = vector.broadcast %10 : vector<1x128xf32> to vector<4x128xf32>
    %13 = arith.mulf %11, %12 : vector<4x128xf32>
    %14 = arith.addf %7, %13 : vector<4x128xf32>
    %15 = vector.extract_strided_slice %0 {offsets = [0, 1], sizes = [4, 1], strides = [1, 1]} : vector<4x4xf32> to vector<4x1xf32>
    %c0_9 = arith.constant 0 : index
    %c1 = arith.constant 1 : index
    %c0_10 = arith.constant 0 : index
    %16 = vector.load %arg3[%c0_9, %c1, %c0_10] : memref<1x4x128xf32, #tpu.memory_space<vmem>>, vector<1x1x128xf32>
    %17 = vector.shape_cast %16 : vector<1x1x128xf32> to vector<1x128xf32>
    %18 = vector.broadcast %15 : vector<4x1xf32> to vector<4x128xf32>
    %19 = vector.broadcast %17 : vector<1x128xf32> to vector<4x128xf32>
    %20 = arith.mulf %18, %19 : vector<4x128xf32>
    %21 = arith.addf %14, %20 : vector<4x128xf32>
    %22 = vector.extract_strided_slice %1 {offsets = [0, 1], sizes = [4, 1], strides = [1, 1]} : vector<4x4xf32> to vector<4x1xf32>
    %c0_11 = arith.constant 0 : index
    %c1_12 = arith.constant 1 : index
    %c0_13 = arith.constant 0 : index
    %23 = vector.load %arg2[%c0_11, %c1_12, %c0_13] : memref<1x4x128xf32, #tpu.memory_space<vmem>>, vector<1x1x128xf32>
    %24 = vector.shape_cast %23 : vector<1x1x128xf32> to vector<1x128xf32>
    %25 = vector.broadcast %22 : vector<4x1xf32> to vector<4x128xf32>
    %26 = vector.broadcast %24 : vector<1x128xf32> to vector<4x128xf32>
    %27 = arith.mulf %25, %26 : vector<4x128xf32>
    %28 = arith.addf %21, %27 : vector<4x128xf32>
    %29 = vector.extract_strided_slice %0 {offsets = [0, 2], sizes = [4, 1], strides = [1, 1]} : vector<4x4xf32> to vector<4x1xf32>
    %c0_14 = arith.constant 0 : index
    %c2 = arith.constant 2 : index
    %c0_15 = arith.constant 0 : index
    %30 = vector.load %arg3[%c0_14, %c2, %c0_15] : memref<1x4x128xf32, #tpu.memory_space<vmem>>, vector<1x1x128xf32>
    %31 = vector.shape_cast %30 : vector<1x1x128xf32> to vector<1x128xf32>
    %32 = vector.broadcast %29 : vector<4x1xf32> to vector<4x128xf32>
    %33 = vector.broadcast %31 : vector<1x128xf32> to vector<4x128xf32>
    %34 = arith.mulf %32, %33 : vector<4x128xf32>
    %35 = arith.addf %28, %34 : vector<4x128xf32>
    %36 = vector.extract_strided_slice %1 {offsets = [0, 2], sizes = [4, 1], strides = [1, 1]} : vector<4x4xf32> to vector<4x1xf32>
    %c0_16 = arith.constant 0 : index
    %c2_17 = arith.constant 2 : index
    %c0_18 = arith.constant 0 : index
    %37 = vector.load %arg2[%c0_16, %c2_17, %c0_18] : memref<1x4x128xf32, #tpu.memory_space<vmem>>, vector<1x1x128xf32>
    %38 = vector.shape_cast %37 : vector<1x1x128xf32> to vector<1x128xf32>
    %39 = vector.broadcast %36 : vector<4x1xf32> to vector<4x128xf32>
    %40 = vector.broadcast %38 : vector<1x128xf32> to vector<4x128xf32>
    %41 = arith.mulf %39, %40 : vector<4x128xf32>
    %42 = arith.addf %35, %41 : vector<4x128xf32>
    %43 = vector.extract_strided_slice %0 {offsets = [0, 3], sizes = [4, 1], strides = [1, 1]} : vector<4x4xf32> to vector<4x1xf32>
    %c0_19 = arith.constant 0 : index
    %c3 = arith.constant 3 : index
    %c0_20 = arith.constant 0 : index
    %44 = vector.load %arg3[%c0_19, %c3, %c0_20] : memref<1x4x128xf32, #tpu.memory_space<vmem>>, vector<1x1x128xf32>
    %45 = vector.shape_cast %44 : vector<1x1x128xf32> to vector<1x128xf32>
    %46 = vector.broadcast %43 : vector<4x1xf32> to vector<4x128xf32>
    %47 = vector.broadcast %45 : vector<1x128xf32> to vector<4x128xf32>
    %48 = arith.mulf %46, %47 : vector<4x128xf32>
    %49 = arith.addf %42, %48 : vector<4x128xf32>
    %50 = vector.extract_strided_slice %1 {offsets = [0, 3], sizes = [4, 1], strides = [1, 1]} : vector<4x4xf32> to vector<4x1xf32>
    %c0_21 = arith.constant 0 : index
    %c3_22 = arith.constant 3 : index
    %c0_23 = arith.constant 0 : index
    %51 = vector.load %arg2[%c0_21, %c3_22, %c0_23] : memref<1x4x128xf32, #tpu.memory_space<vmem>>, vector<1x1x128xf32>
    %52 = vector.shape_cast %51 : vector<1x1x128xf32> to vector<1x128xf32>
    %53 = vector.broadcast %50 : vector<4x1xf32> to vector<4x128xf32>
    %54 = vector.broadcast %52 : vector<1x128xf32> to vector<4x128xf32>
    %55 = arith.mulf %53, %54 : vector<4x128xf32>
    %56 = arith.addf %49, %55 : vector<4x128xf32>
    %cst = arith.constant 1.000000e-01 : f32
    %57 = vector.broadcast %cst : f32 to vector<4x128xf32>
    %58 = arith.subf %56, %57 : vector<4x128xf32>
    %59 = arith.negf %58 : vector<4x128xf32>
    %60 = math.exp %59 : vector<4x128xf32>
    %cst_24 = arith.constant 1.000000e+00 : f32
    %61 = vector.broadcast %cst_24 : f32 to vector<4x128xf32>
    %62 = arith.addf %61, %60 : vector<4x128xf32>
    %63 = arith.divf %61, %62 : vector<4x128xf32>
    %c0_25 = arith.constant 0 : index
    %c0_26 = arith.constant 0 : index
    %c0_27 = arith.constant 0 : index
    %64 = vector.load %arg2[%c0_25, %c0_26, %c0_27] : memref<1x4x128xf32, #tpu.memory_space<vmem>>, vector<1x4x128xf32>
    %65 = vector.shape_cast %64 : vector<1x4x128xf32> to vector<4x128xf32>
    %c0_28 = arith.constant 0 : index
    %c0_29 = arith.constant 0 : index
    %c0_30 = arith.constant 0 : index
    %66 = vector.load %arg3[%c0_28, %c0_29, %c0_30] : memref<1x4x128xf32, #tpu.memory_space<vmem>>, vector<1x4x128xf32>
    %67 = vector.shape_cast %66 : vector<1x4x128xf32> to vector<4x128xf32>
    %cst_31 = arith.constant 1.000000e+00 : f32
    %68 = vector.broadcast %cst_31 : f32 to vector<4x128xf32>
    %69 = arith.subf %68, %63 : vector<4x128xf32>
    %70 = arith.mulf %69, %65 : vector<4x128xf32>
    %71 = arith.mulf %63, %67 : vector<4x128xf32>
    %72 = arith.addf %70, %71 : vector<4x128xf32>
    %c0_32 = arith.constant 0 : index
    %c0_33 = arith.constant 0 : index
    %c0_34 = arith.constant 0 : index
    %73 = vector.load %arg6[%c0_32, %c0_33, %c0_34] : memref<1x4x128xf32, #tpu.memory_space<vmem>>, vector<1x4x128xf32>
    %74 = vector.shape_cast %73 : vector<1x4x128xf32> to vector<4x128xf32>
    %75 = vector.shape_cast %72 : vector<4x128xf32> to vector<1x4x128xf32>
    tpu.vector_store %arg6[%c0_32, %c0_33, %c0_34], %75 {strides = array<i32>} : memref<1x4x128xf32, #tpu.memory_space<vmem>>, vector<1x4x128xf32>,
    return
  }
  func.func @transform_0(%arg0: i32, %arg1: i32) -> (i32, i32, i32) {
    %c0_i32 = arith.constant 0 : i32
    %c0_i32_0 = arith.constant 0 : i32
    return %arg0, %c0_i32, %arg1 : i32, i32, i32
  }
  func.func @transform_1(%arg0: i32, %arg1: i32) -> (i32, i32, i32) {
    %c0_i32 = arith.constant 0 : i32
    %c0_i32_0 = arith.constant 0 : i32
    return %arg0, %c0_i32, %arg1 : i32, i32, i32
  }
  func.func @transform_2(%arg0: i32, %arg1: i32) -> (i32, i32) {
    %c0_i32 = arith.constant 0 : i32
    %c0_i32_0 = arith.constant 0 : i32
    %c0_i32_1 = arith.constant 0 : i32
    return %c0_i32, %c0_i32_0 : i32, i32
  }
  func.func @transform_3(%arg0: i32, %arg1: i32) -> (i32, i32) {
    %c0_i32 = arith.constant 0 : i32
    %c0_i32_0 = arith.constant 0 : i32
    %c0_i32_1 = arith.constant 0 : i32
    return %c0_i32, %c0_i32_0 : i32, i32
  }
  func.func @transform_4(%arg0: i32, %arg1: i32) -> (i32, i32, i32) {
    %c0_i32 = arith.constant 0 : i32
    %c0_i32_0 = arith.constant 0 : i32
    return %arg0, %c0_i32, %arg1 : i32, i32, i32
  }
}

</mosaic_0001>

<llo_original>
// kernel: tpu_custom_call.1
$region0: #{tpu_custom_call.1}
  #allocation0 [shape = 'u32[]', space=smem, size = 0x4, offset = 0x4, fixed_abs, tag = 'smem constant byte address 0x4 - core index']
  #allocation1 [shape = 'u32[144,128]{1,0:T(1,128)}', space=vmem, size = 0x12000, scoped, tag = 'internal scratch']
  %s0 = inlined_call_operand.hbm [shape: f32[2,4,256], index: 0, kind: input, shape index: {}]
  %s1 = inlined_call_operand.hbm [shape: f32[2,4,256], index: 1, kind: input, shape index: {}]
  %s2 = inlined_call_operand.hbm [shape: f32[4,4], index: 2, kind: input, shape index: {}]
  %s3 = inlined_call_operand.vmem [shape: f32[4,4], index: 3, kind: input, shape index: {}]
  %s4 = inlined_call_operand.hbm [shape: f32[2,4,256], index: 4, kind: output, shape index: {}]
  %s5 = sld [smem:[#allocation0]]
  $region61: #{tpu_custom_call.1} parent=0
    _
  %s7 = ssub.s32 1, %s5
  %s8 = scalar_select 0, %s7, %s5
  $region1: #{tpu_custom_call.1} parent=0
    #allocation2 [shape = 'u8[4096]{0}', space=vmem, size = 0x1000, scoped, tag = 'input window, operand 0']
    #allocation3 [shape = 's32[2]{0}', space=sflag, size = 0x8, scoped, tag = 'scoped memory for tpu_custom_call.1']
    #allocation4 [shape = 's32[2]{0}', space=sflag, size = 0x8, scoped, tag = 'scoped memory for tpu_custom_call.1']
    #allocation5 [shape = 'u8[4096]{0}', space=vmem, size = 0x1000, scoped, tag = 'input window, operand 1']
    #allocation6 [shape = 's32[2]{0}', space=sflag, size = 0x8, scoped, tag = 'scoped memory for tpu_custom_call.1']
    #allocation7 [shape = 'u8[2048]{0}', space=vmem, size = 0x800, scoped, tag = 'input window, operand 2, single buffered']
    #allocation8 [shape = 'u8[4096]{0}', space=vmem, size = 0x1000, scoped, tag = 'output window, operand 0']
    %9 = vsyncpa [#allocation3], 0
    %s10 = scalar_lea.sflag [#allocation3], 1
    %11 = vsyncpa %s10, 0
    %12 = vsyncpa [#allocation6], 0
    %s13 = scalar_lea.sflag [#allocation6], 1
    %14 = vsyncpa %s13, 0
    %15 = vsyncpa [#allocation4], 0
    %s16 = scalar_lea.sflag [#allocation4], 1
    %17 = vsyncpa %s16, 0
    loop: start=0, step=1, limit=6
    $region2: #{tpu_custom_call.1} parent=1 // loop_pre_header
      _
    $region3: #{tpu_custom_call.1} parent=1 // loop_header
      %s19 = sphi 0, %s23
      %p20 = scmp.ge.s32.totalorder %s19, 6
      %s26 = sphi 0, %s38
      %s27 = sphi 0, %s34
      %s28 = sphi 0, %s26
      %s29 = sphi 0, %s27
      %s30 = sphi 0, %s28
      %s31 = sphi 0, %s29
      %s43 = sphi 0, %s45
      %s46 = sphi 0, %s43
      %s47 = sphi 0, %s46
      %s63 = sphi 0, %s47
      %s71 = sphi 0, %s73
      %s74 = sphi 0, %s71
      %s75 = sphi 0, %s74
      %s91 = sphi 0, %s75
      %s95 = sphi 0, %s95
      %s97 = sphi 0, %s95
      %s98 = sphi 0, %s97
      %s112 = sphi 0, %s98
      %s116 = sphi 0, %s116
      %s118 = sphi 0, %s116
      %s119 = sphi 0, %s118
      %s133 = sphi 0, %s119
      %s141 = sphi 0, %s143
      %s144 = sphi 0, %s141
      %s145 = sphi 0, %s144
      %s161 = sphi 0, %s145
    $region4: #{tpu_custom_call.1} parent=1 // loop_header_branch
      %22 = sbr.rel (%p20) target = $region8
    $region5: #{tpu_custom_call.1} parent=1 // loop_body
      %s24 = ssub.s32 %s19, 1
      %s25 = ssub.s32 %s19, 2
      %s32 = sadd.s32 1, %s27
      %p33 = scmp.ge.s32.totalorder %s32, 2
      %s34 = scalar_select %p33, 0, %s32
      %s35 = sadd.s32 1, %s26
      %s36 = scalar_select %p33, %s35, %s26
      %p37 = scmp.ge.s32.totalorder %s36, 2
      %s38 = scalar_select %p37, 0, %s36
      %s39 = ssub.s32 %s26, %s38
      %s40 = ssub.s32 %s27, %s34
      %s41 = sor.u32 %s39, %s40
      %p42 = scmp.eq.s32.totalorder %s41, 0
      %s44 = sadd.s32 %s43, 1
      %s45 = scalar_select %p42, %s43, %s44
      %p48 = pneg %p42
      %p49 = scmp.eq.s32.totalorder %s19, 3
      %p50 = por %p48, %p49
      %p51 = scmp.ne.s32.totalorder %s43, %s46
      %p52 = scmp.eq.s32.totalorder %s19, 0
      %p53 = por %p51, %p52
      %p54 = scmp.ne.s32.totalorder %s43, %s46
      %p55 = scmp.eq.s32.totalorder %s24, 3
      %p56 = por %p54, %p55
      %p57 = scmp.ne.s32.totalorder %s46, %s47
      %p58 = scmp.eq.s32.totalorder %s24, 0
      %p59 = por %p57, %p58
      %p60 = scmp.ne.s32.totalorder %s46, %s47
      %p61 = scmp.eq.s32.totalorder %s25, 3
      %p62 = por %p60, %p61
      %p64 = scmp.ne.s32.totalorder %s47, %s63
      %p65 = scmp.eq.s32.totalorder %s25, 0
      %p66 = por %p64, %p65
      %s67 = ssub.s32 %s26, %s38
      %s68 = ssub.s32 %s27, %s34
      %s69 = sor.u32 %s67, %s68
      %p70 = scmp.eq.s32.totalorder %s69, 0
      %s72 = sadd.s32 %s71, 1
      %s73 = scalar_select %p70, %s71, %s72
      %p76 = pneg %p70
      %p77 = scmp.eq.s32.totalorder %s19, 3
      %p78 = por %p76, %p77
      %p79 = scmp.ne.s32.totalorder %s71, %s74
      %p80 = scmp.eq.s32.totalorder %s19, 0
      %p81 = por %p79, %p80
      %p82 = scmp.ne.s32.totalorder %s71, %s74
      %p83 = scmp.eq.s32.totalorder %s24, 3
      %p84 = por %p82, %p83
      %p85 = scmp.ne.s32.totalorder %s74, %s75
      %p86 = scmp.eq.s32.totalorder %s24, 0
      %p87 = por %p85, %p86
      %p88 = scmp.ne.s32.totalorder %s74, %s75
      %p89 = scmp.eq.s32.totalorder %s25, 3
      %p90 = por %p88, %p89
      %p92 = scmp.ne.s32.totalorder %s75, %s91
      %p93 = scmp.eq.s32.totalorder %s25, 0
      %p94 = por %p92, %p93
      %s96 = sadd.s32 %s95, 1
      %p99 = scmp.eq.s32.totalorder %s19, 3
      %p100 = scmp.ne.s32.totalorder %s95, %s97
      %p101 = scmp.eq.s32.totalorder %s19, 0
      %p102 = por %p100, %p101
      %p103 = scmp.ne.s32.totalorder %s95, %s97
      %p104 = scmp.eq.s32.totalorder %s24, 3
      %p105 = por %p103, %p104
      %p106 = scmp.ne.s32.totalorder %s97, %s98
      %p107 = scmp.eq.s32.totalorder %s24, 0
      %p108 = por %p106, %p107
      %p109 = scmp.ne.s32.totalorder %s97, %s98
      %p110 = scmp.eq.s32.totalorder %s25, 3
      %p111 = por %p109, %p110
      %p113 = scmp.ne.s32.totalorder %s98, %s112
      %p114 = scmp.eq.s32.totalorder %s25, 0
      %p115 = por %p113, %p114
      %s117 = sadd.s32 %s116, 1
      %p120 = scmp.eq.s32.totalorder %s19, 3
      %p121 = scmp.ne.s32.totalorder %s116, %s118
      %p122 = scmp.eq.s32.totalorder %s19, 0
      %p123 = por %p121, %p122
      %p124 = scmp.ne.s32.totalorder %s116, %s118
      %p125 = scmp.eq.s32.totalorder %s24, 3
      %p126 = por %p124, %p125
      %p127 = scmp.ne.s32.totalorder %s118, %s119
      %p128 = scmp.eq.s32.totalorder %s24, 0
      %p129 = por %p127, %p128
      %p130 = scmp.ne.s32.totalorder %s118, %s119
      %p131 = scmp.eq.s32.totalorder %s25, 3
      %p132 = por %p130, %p131
      %p134 = scmp.ne.s32.totalorder %s119, %s133
      %p135 = scmp.eq.s32.totalorder %s25, 0
      %p136 = por %p134, %p135
      %s137 = ssub.s32 %s26, %s38
      %s138 = ssub.s32 %s27, %s34
      %s139 = sor.u32 %s137, %s138
      %p140 = scmp.eq.s32.totalorder %s139, 0
      %s142 = sadd.s32 %s141, 1
      %s143 = scalar_select %p140, %s141, %s142
      %p146 = pneg %p140
      %p147 = scmp.eq.s32.totalorder %s19, 3
      %p148 = por %p146, %p147
      %p149 = scmp.ne.s32.totalorder %s141, %s144
      %p150 = scmp.eq.s32.totalorder %s19, 0
      %p151 = por %p149, %p150
      %p152 = scmp.ne.s32.totalorder %s141, %s144
      %p153 = scmp.eq.s32.totalorder %s24, 3
      %p154 = por %p152, %p153
      %p155 = scmp.ne.s32.totalorder %s144, %s145
      %p156 = scmp.eq.s32.totalorder %s24, 0
      %p157 = por %p155, %p156
      %p158 = scmp.ne.s32.totalorder %s144, %s145
      %p159 = scmp.eq.s32.totalorder %s25, 3
      %p160 = por %p158, %p159
      %p162 = scmp.ne.s32.totalorder %s145, %s161
      %p163 = scmp.eq.s32.totalorder %s25, 0
      %p164 = por %p162, %p163
      %p165 = scmp.le.s32.totalorder 1, %s19
      %p166 = scmp.lt.s32.totalorder %s19, 5
      %p167 = pnand %p165, %p166
      %p168 = pneg %p167
      // Predicated region
      $region9: #{tpu_custom_call.1} parent=5 // pred_check
        _
      $region10: #{tpu_custom_call.1} parent=5 // pred_check_branch
        %170 = sbr.rel (%p167) target = $region12
      $region11: #{tpu_custom_call.1} parent=5 // pred_region
        %s171 = ssub.s32 %s19, 1
        // Predicated region
        $region13: #{tpu_custom_call.1} parent=11 // pred_check
          %p172 = pneg %p108
        $region14: #{tpu_custom_call.1} parent=11 // pred_check_branch
          %174 = sbr.rel (%p172) target = $region16
        $region15: #{tpu_custom_call.1} parent=11 // pred_region
          %s176 = ssub.s32 64, 64
          %177 = vsyncadd [#allocation6], %s176
          %s179 = sshll.u32 [#allocation7], 4
          %s180 = int_to_ptr.vmem [resolvable:$true] %s179
          %182 = dma.hbm_to_vmem [thread:$0]  %s2, 64, %s180, [#allocation6]
        $region16: #{tpu_custom_call.1} parent=11 // pred_fallthru
          _
        // Predicated region
        $region17: #{tpu_custom_call.1} parent=11 // pred_check
          %p183 = pneg %p129
        $region18: #{tpu_custom_call.1} parent=11 // pred_check_branch
          %185 = sbr.rel (%p183) target = $region20
        $region19: #{tpu_custom_call.1} parent=11 // pred_region
          _
        $region20: #{tpu_custom_call.1} parent=11 // pred_fallthru
          _
      $region12: #{tpu_custom_call.1} parent=5 // pred_fallthru
        _
      %p186 = scmp.lt.s32.totalorder %s19, 4
      // Predicated region
      $region21: #{tpu_custom_call.1} parent=5 // pred_check
        %p187 = pneg %p186
      $region22: #{tpu_custom_call.1} parent=5 // pred_check_branch
        %189 = sbr.rel (%p187) target = $region24
      $region23: #{tpu_custom_call.1} parent=5 // pred_region
        // Predicated region
        $region25: #{tpu_custom_call.1} parent=23 // pred_check
          %p190 = pneg %p53
        $region26: #{tpu_custom_call.1} parent=23 // pred_check_branch
          %192 = sbr.rel (%p190) target = $region28
        $region27: #{tpu_custom_call.1} parent=23 // pred_region
          %s193 = sand.u32 %s43, 1
          %s194 = scalar_lea.sflag [#allocation3], %s193
          %s195 = sand.u32 %s43, 1
          %s196 = smul.addr %s195, 4
          %s197 = scalar_lea.vmem [#allocation2], %s196
          %s199 = ssub.s32 64, 64
          %200 = vsyncadd %s194, %s199
          %s201 = smul.addr %s26, 2
          %s202 = sadd.s32 %s27, %s201
          %s203 = smul.addr %s202, 64
          %s204 = scalar_lea.hbm %s0, %s203
          %s206 = sshll.u32 %s197, 4
          %s207 = int_to_ptr.vmem [resolvable:$true] %s206
          %209 = dma.hbm_to_vmem [thread:$0]  %s204, 64, %s207, %s194
        $region28: #{tpu_custom_call.1} parent=23 // pred_fallthru
          _
        // Predicated region
        $region29: #{tpu_custom_call.1} parent=23 // pred_check
          %p210 = pneg %p81
        $region30: #{tpu_custom_call.1} parent=23 // pred_check_branch
          %212 = sbr.rel (%p210) target = $region32
        $region31: #{tpu_custom_call.1} parent=23 // pred_region
          %s213 = sand.u32 %s19, 1
          %s214 = scalar_lea.sflag [#allocation6], %s213
          %s215 = sand.u32 %s71, 1
          %s216 = smul.addr %s215, 4
          %s217 = scalar_lea.vmem [#allocation5], %s216
          %s219 = ssub.s32 64, 64
          %220 = vsyncadd %s214, %s219
          %s221 = smul.addr %s26, 2
          %s222 = sadd.s32 %s27, %s221
          %s223 = smul.addr %s222, 64
          %s224 = scalar_lea.hbm %s1, %s223
          %s226 = sshll.u32 %s217, 4
          %s227 = int_to_ptr.vmem [resolvable:$true] %s226
          %229 = dma.hbm_to_vmem [thread:$0]  %s224, 64, %s227, %s214
        $region32: #{tpu_custom_call.1} parent=23 // pred_fallthru
          _
      $region24: #{tpu_custom_call.1} parent=5 // pred_fallthru
        _
      %p230 = scmp.le.s32.totalorder 1, %s19
      %p231 = scmp.lt.s32.totalorder %s19, 5
      %p232 = pnand %p230, %p231
      %p233 = pneg %p232
      // Predicated region
      $region33: #{tpu_custom_call.1} parent=5 // pred_check
        _
      $region34: #{tpu_custom_call.1} parent=5 // pred_check_branch
        %235 = sbr.rel (%p232) target = $region36
      $region35: #{tpu_custom_call.1} parent=5 // pred_region
        %s236 = ssub.s32 %s19, 1
        %s237 = sand.u32 %s46, 1
        %s238 = scalar_lea.sflag [#allocation3], %s237
        %s239 = sand.u32 %s46, 1
        %s240 = smul.addr %s239, 4
        %s241 = scalar_lea.vmem [#allocation2], %s240
        // Predicated region
        $region37: #{tpu_custom_call.1} parent=35 // pred_check
          %p242 = pneg %p59
        $region38: #{tpu_custom_call.1} parent=35 // pred_check_branch
          %244 = sbr.rel (%p242) target = $region40
        $region39: #{tpu_custom_call.1} parent=35 // pred_region
          %245 = dma.done %s238, 64
        $region40: #{tpu_custom_call.1} parent=35 // pred_fallthru
          _
        %s246 = sand.u32 %s24, 1
        %s247 = scalar_lea.sflag [#allocation6], %s246
        %s248 = sand.u32 %s74, 1
        %s249 = smul.addr %s248, 4
        %s250 = scalar_lea.vmem [#allocation5], %s249
        // Predicated region
        $region41: #{tpu_custom_call.1} parent=35 // pred_check
          %p251 = pneg %p87
        $region42: #{tpu_custom_call.1} parent=35 // pred_check_branch
          %253 = sbr.rel (%p251) target = $region44
        $region43: #{tpu_custom_call.1} parent=35 // pred_region
          %254 = dma.done %s247, 64
        $region44: #{tpu_custom_call.1} parent=35 // pred_fallthru
          _
        // Predicated region
        $region45: #{tpu_custom_call.1} parent=35 // pred_check
          %p255 = pneg %p108
        $region46: #{tpu_custom_call.1} parent=35 // pred_check_branch
          %257 = sbr.rel (%p255) target = $region48
        $region47: #{tpu_custom_call.1} parent=35 // pred_region
          %258 = dma.done [#allocation6], 64
        $region48: #{tpu_custom_call.1} parent=35 // pred_fallthru
          _
        %s259 = sand.u32 %s46, 1
        %s260 = scalar_lea.sflag [#allocation3], %s259
        %s261 = sand.u32 %s46, 1
        %s262 = smul.addr %s261, 4
        %s263 = scalar_lea.vmem [#allocation2], %s262
        %p264 = pneg %p59
        %p265 = pneg %p56
        %s266 = sand.u32 %s24, 1
        %s267 = scalar_lea.sflag [#allocation6], %s266
        %s268 = sand.u32 %s74, 1
        %s269 = smul.addr %s268, 4
        %s270 = scalar_lea.vmem [#allocation5], %s269
        %p271 = pneg %p87
        %p272 = pneg %p84
        %p273 = pneg %p108
        %p274 = pneg %p105
        %p275 = pneg %p129
        %p276 = pneg %p126
        %p277 = pneg %p157
        %p278 = pneg %p154
        %s279 = sand.u32 %s144, 1
        %s280 = scalar_lea.sflag [#allocation4], %s279
        %s281 = sand.u32 %s144, 1
        %s282 = smul.addr %s281, 4
        %s283 = scalar_lea.vmem [#allocation8], %s282
        %v284 = vld [vmem:[#allocation7] sm:$0xf]
        %v285 = vld [vmem:[%s3] sm:$0xf]
        %v286 = vld [vmem:[%s250] sm:$0x1]
        %288 = vset.pattern.permute.xlu0 0
        %289 = vperm.xlu0 %288, %v284
        %v290 = vpop.permute.xlu0 %289
        %v292 = vlaneseq
        %v293 = vshrl.u32 %v292, 7
        %v294 = vsub.s32 0, %v293
        %v295 = vrot.slane %v286, %v294
        %v296 = vmul.f32 %v290, %v295
        %v297 = vld [vmem:[%s241] sm:$0x1]
        %299 = vset.pattern.permute.xlu0 0
        %300 = vperm.xlu0 %299, %v285
        %v301 = vpop.permute.xlu0 %300
        %v303 = vlaneseq
        %v304 = vshrl.u32 %v303, 7
        %v305 = vsub.s32 0, %v304
        %v306 = vrot.slane %v297, %v305
        %v307 = vmul.f32 %v301, %v306
        %v308 = vadd.f32 %v296, %v307
        %v309 = vld [vmem:[%s250 + $0x1] sm:$0x1]
        %310 = vset.pattern.permute.xlu0 1
        %311 = vperm.xlu0 %310, %v284
        %v312 = vpop.permute.xlu0 %311
        %v314 = vlaneseq
        %v315 = vshrl.u32 %v314, 7
        %v316 = vsub.s32 0, %v315
        %v317 = vrot.slane %v309, %v316
        %v318 = vmul.f32 %v312, %v317
        %v319 = vadd.f32 %v308, %v318
        %v320 = vld [vmem:[%s241 + $0x1] sm:$0x1]
        %321 = vset.pattern.permute.xlu0 1
        %322 = vperm.xlu0 %321, %v285
        %v323 = vpop.permute.xlu0 %322
        %v325 = vlaneseq
        %v326 = vshrl.u32 %v325, 7
        %v327 = vsub.s32 0, %v326
        %v328 = vrot.slane %v320, %v327
        %v329 = vmul.f32 %v323, %v328
        %v330 = vadd.f32 %v319, %v329
        %v331 = vld [vmem:[%s250 + $0x2] sm:$0x1]
        %332 = vset.pattern.permute.xlu0 2
        %333 = vperm.xlu0 %332, %v284
        %v334 = vpop.permute.xlu0 %333
        %v336 = vlaneseq
        %v337 = vshrl.u32 %v336, 7
        %v338 = vsub.s32 0, %v337
        %v339 = vrot.slane %v331, %v338
        %v340 = vmul.f32 %v334, %v339
        %v341 = vadd.f32 %v330, %v340
        %v342 = vld [vmem:[%s241 + $0x2] sm:$0x1]
        %343 = vset.pattern.permute.xlu0 2
        %344 = vperm.xlu0 %343, %v285
        %v345 = vpop.permute.xlu0 %344
        %v347 = vlaneseq
        %v348 = vshrl.u32 %v347, 7
        %v349 = vsub.s32 0, %v348
        %v350 = vrot.slane %v342, %v349
        %v351 = vmul.f32 %v345, %v350
        %v352 = vadd.f32 %v341, %v351
        %v353 = vld [vmem:[%s250 + $0x3] sm:$0x1]
        %354 = vset.pattern.permute.xlu0 3
        %355 = vperm.xlu0 %354, %v284
        %v356 = vpop.permute.xlu0 %355
        %v358 = vlaneseq
        %v359 = vshrl.u32 %v358, 7
        %v360 = vsub.s32 0, %v359
        %v361 = vrot.slane %v353, %v360
        %v362 = vmul.f32 %v356, %v361
        %v363 = vadd.f32 %v352, %v362
        %v364 = vld [vmem:[%s241 + $0x3] sm:$0x1]
        %365 = vset.pattern.permute.xlu0 3
        %366 = vperm.xlu0 %365, %v285
        %v367 = vpop.permute.xlu0 %366
        %v369 = vlaneseq
        %v370 = vshrl.u32 %v369, 7
        %v371 = vsub.s32 0, %v370
        %v372 = vrot.slane %v364, %v371
        %v373 = vmul.f32 %v367, %v372
        %v374 = vadd.f32 %v363, %v373
        %v375 = vsub.f32 %v374, 0.1
        %v376 = vxor.u32 %v375, 2147483648
        %v377 = vmul.f32 %v376, 1.442695
        %v378 = vpow.pop %v377
        %v379 = vadd.f32 %v378, 1.0
        %v380 = vrcp.pop %v379
        %v381 = vmul.f32 1.0, %v380
        %v382 = vld [vmem:[%s241] sm:$0xf]
        %v383 = vld [vmem:[%s250] sm:$0xf]
        %v384 = vsub.f32 1.0, %v381
        %v385 = vmul.f32 %v384, %v382
        %v386 = vmul.f32 %v381, %v383
        %v387 = vadd.f32 %v385, %v386
        %388 = vst [vmem:[%s283] sm:$0xf] %v387
        %s389 = sand.u32 %s144, 1
        %s390 = scalar_lea.sflag [#allocation4], %s389
        %s391 = sand.u32 %s144, 1
        %s392 = smul.addr %s391, 4
        %s393 = scalar_lea.vmem [#allocation8], %s392
        // Predicated region
        $region49: #{tpu_custom_call.1} parent=35 // pred_check
          %p394 = pneg %p154
        $region50: #{tpu_custom_call.1} parent=35 // pred_check_branch
          %396 = sbr.rel (%p394) target = $region52
        $region51: #{tpu_custom_call.1} parent=35 // pred_region
          %s398 = ssub.s32 64, 64
          %399 = vsyncadd %s390, %s398
          %s400 = smul.addr %s28, 2
          %s401 = sadd.s32 %s29, %s400
          %s402 = smul.addr %s401, 64
          %s403 = scalar_lea.hbm %s4, %s402
          %s405 = sshll.u32 %s393, 4
          %s406 = int_to_ptr.vmem [resolvable:$true] %s405
          %408 = dma.vmem_to_hbm [thread:$0]  %s406, 64, %s403, %s390
        $region52: #{tpu_custom_call.1} parent=35 // pred_fallthru
          _
      $region36: #{tpu_custom_call.1} parent=5 // pred_fallthru
        _
      %p409 = scmp.le.s32.totalorder 2, %s19
      // Predicated region
      $region53: #{tpu_custom_call.1} parent=5 // pred_check
        %p410 = pneg %p409
      $region54: #{tpu_custom_call.1} parent=5 // pred_check_branch
        %412 = sbr.rel (%p410) target = $region56
      $region55: #{tpu_custom_call.1} parent=5 // pred_region
        %s413 = ssub.s32 %s19, 2
        // Predicated region
        $region57: #{tpu_custom_call.1} parent=55 // pred_check
          %p414 = pneg %p160
        $region58: #{tpu_custom_call.1} parent=55 // pred_check_branch
          %416 = sbr.rel (%p414) target = $region60
        $region59: #{tpu_custom_call.1} parent=55 // pred_region
          %s417 = sand.u32 %s145, 1
          %s418 = scalar_lea.sflag [#allocation4], %s417
          %s419 = sand.u32 %s145, 1
          %s420 = smul.addr %s419, 4
          %s421 = scalar_lea.vmem [#allocation8], %s420
          %422 = dma.done %s418, 64
        $region60: #{tpu_custom_call.1} parent=55 // pred_fallthru
          _
      $region56: #{tpu_custom_call.1} parent=5 // pred_fallthru
        _
    $region6: #{tpu_custom_call.1} parent=1 // loop_footer
      %s23 = sadd.s32 1, %s19
    $region7: #{tpu_custom_call.1} parent=1 // loop_footer_branch
      %18 = sbr.rel target = $region3
    $region8: #{tpu_custom_call.1} parent=1 // loop_exit
      _
    %423 = vsyncpa [#allocation3], 1
    %s424 = scalar_lea.sflag [#allocation3], 1
    %425 = vsyncpa %s424, 1
    %426 = vsyncpa [#allocation6], 1
    %s427 = scalar_lea.sflag [#allocation6], 1
    %428 = vsyncpa %s427, 1
    %429 = vsyncpa [#allocation4], 1
    %s430 = scalar_lea.sflag [#allocation4], 1
    %431 = vsyncpa %s430, 1

</llo_original>
